<compile_context>
chip_gen: v6e
topology: v6e:2x2x1
jax: 0.10.0
libtpu: 0.0.40
codegen_flags: <defaults>
</compile_context>

<pallas_src>
import functools

import jax
import jax.numpy as jnp
from jax.experimental import pallas as pl
from jax.experimental.pallas import tpu as pltpu

EPS = 1e-5


# ---------------------------------------------------------------------------
# Fused single-pass kernel (N == 1 fast path): stats + normalize + residual add.
# ---------------------------------------------------------------------------
def _bn_add_fused_kernel(x_ref, res_ref, gamma_ref, beta_ref, o_ref, *, true_l):
    # x_ref, res_ref, o_ref: (Cb, L).  gamma_ref, beta_ref: (Cb, 1).
    x = x_ref[...].astype(jnp.float32)
    inv_l = jnp.float32(1.0 / true_l)

    # Two-pass batch statistics (x stays resident in VMEM, second pass ~free).
    mean = jnp.sum(x, axis=1, keepdims=True) * inv_l          # (Cb, 1)
    centered = x - mean
    var = jnp.sum(centered * centered, axis=1, keepdims=True) * inv_l
    inv_std = jax.lax.rsqrt(var + EPS)                        # (Cb, 1)

    # Fold affine into per-channel scale/shift: y = x*scale + shift + res.
    scale = gamma_ref[...] * inv_std
    shift = beta_ref[...] - mean * scale

    # Residual loaded late, directly in the store expression.
    o_ref[...] = (x * scale + shift + res_ref[...].astype(jnp.float32)).astype(
        o_ref.dtype)


# ---------------------------------------------------------------------------
# N > 1 fallback (transpose-free): stats accumulation pass + normalize pass.
# ---------------------------------------------------------------------------
def _stats_kernel(x_ref, sum_ref, sumsq_ref):
    # x_ref: (1, C, HW) block for batch n.  sum/sumsq: (C, 1) resident outputs.
    x = x_ref[0].astype(jnp.float32)                          # (C, HW)
    s = jnp.sum(x, axis=1, keepdims=True)
    sq = jnp.sum(x * x, axis=1, keepdims=True)

    @pl.when(pl.program_id(0) == 0)
    def _():
        sum_ref[...] = jnp.zeros_like(sum_ref)
        sumsq_ref[...] = jnp.zeros_like(sumsq_ref)

    sum_ref[...] += s
    sumsq_ref[...] += sq


def _norm_add_kernel(x_ref, res_ref, sum_ref, sumsq_ref, gamma_ref, beta_ref,
                     o_ref, *, true_l):
    inv_l = jnp.float32(1.0 / true_l)
    mean = sum_ref[...] * inv_l
    var = jnp.maximum(sumsq_ref[...] * inv_l - mean * mean, 0.0)
    inv_std = jax.lax.rsqrt(var + EPS)
    scale = gamma_ref[...] * inv_std
    shift = beta_ref[...] - mean * scale
    x = x_ref[0].astype(jnp.float32)
    o_ref[0] = (x * scale + shift + res_ref[0].astype(jnp.float32)).astype(
        o_ref.dtype)


# ---------------------------------------------------------------------------
# Wrapper
# ---------------------------------------------------------------------------
def _batchnorm_add_impl(x, residual, gamma, beta):
    """x, residual: (N, C, H, W) float32.  gamma, beta: (C,)."""
    N, C, H, W = x.shape
    HW = H * W
    L = N * HW

    g2 = gamma.reshape(C, 1).astype(jnp.float32)
    b2 = beta.reshape(C, 1).astype(jnp.float32)

    if N == 1:
        # (1, C, H, W) -> (C, H*W): free reshape, no pad, no transpose.
        x2 = x.reshape(C, L)
        r2 = residual.reshape(C, L)

        # Channel-split grid: per-channel stats are independent, so this axis is
        # cleanly "parallel" (uses both TensorCores on v7x; no-op on v5e/v6e).
        cb = C // 2 if (C % 16 == 0) else C
        grid = (C // cb,)

        out2 = pl.pallas_call(
            functools.partial(_bn_add_fused_kernel, true_l=L),
            out_shape=jax.ShapeDtypeStruct((C, L), x.dtype),
            grid=grid,
            in_specs=[
                pl.BlockSpec((cb, L), lambda i: (i, 0)),
                pl.BlockSpec((cb, L), lambda i: (i, 0)),
                pl.BlockSpec((cb, 1), lambda i: (i, 0)),
                pl.BlockSpec((cb, 1), lambda i: (i, 0)),
            ],
            out_specs=pl.BlockSpec((cb, L), lambda i: (i, 0)),
            input_output_aliases={0: 0},
            cost_estimate=pl.CostEstimate(
                flops=8 * C * L,
                transcendentals=C,
                bytes_accessed=3 * C * L * 4 + 2 * C * 4,
            ),
            compiler_params=pltpu.CompilerParams(
                dimension_semantics=("parallel",)),
        )(x2, r2, g2, b2)
        return out2.reshape(N, C, H, W)

    # ---- N > 1: no materialized transpose; (N, C, H, W) -> (N, C, HW) is free.
    x3 = x.reshape(N, C, HW)
    r3 = residual.reshape(N, C, HW)

    sums, sumsqs = pl.pallas_call(
        _stats_kernel,
        out_shape=(jax.ShapeDtypeStruct((C, 1), jnp.float32),
                   jax.ShapeDtypeStruct((C, 1), jnp.float32)),
        grid=(N,),
        in_specs=[pl.BlockSpec((1, C, HW), lambda n: (n, 0, 0))],
        out_specs=(pl.BlockSpec((C, 1), lambda n: (0, 0)),
                   pl.BlockSpec((C, 1), lambda n: (0, 0))),
        compiler_params=pltpu.CompilerParams(
            dimension_semantics=("arbitrary",)),
    )(x3)

    out3 = pl.pallas_call(
        functools.partial(_norm_add_kernel, true_l=L),
        out_shape=jax.ShapeDtypeStruct((N, C, HW), x.dtype),
        grid=(N,),
        in_specs=[
            pl.BlockSpec((1, C, HW), lambda n: (n, 0, 0)),
            pl.BlockSpec((1, C, HW), lambda n: (n, 0, 0)),
            pl.BlockSpec((C, 1), lambda n: (0, 0)),
            pl.BlockSpec((C, 1), lambda n: (0, 0)),
            pl.BlockSpec((C, 1), lambda n: (0, 0)),
            pl.BlockSpec((C, 1), lambda n: (0, 0)),
        ],
        out_specs=pl.BlockSpec((1, C, HW), lambda n: (n, 0, 0)),
        input_output_aliases={0: 0},
        cost_estimate=pl.CostEstimate(
            flops=4 * N * C * HW,
            transcendentals=C,
            bytes_accessed=3 * N * C * HW * 4 + 4 * C * 4,
        ),
        compiler_params=pltpu.CompilerParams(
            dimension_semantics=("parallel",)),
    )(x3, r3, sums, sumsqs, g2, b2)
    return out3.reshape(N, C, H, W)


batchnorm_add = jax.jit(_batchnorm_add_impl)


def _reference(x, residual, gamma, beta):
    mean = jnp.mean(x, axis=(0, 2, 3), keepdims=True)
    var = jnp.mean((x - mean) ** 2, axis=(0, 2, 3), keepdims=True)
    y = (x - mean) * jax.lax.rsqrt(var + EPS)
    y = y * gamma.reshape(1, -1, 1, 1) + beta.reshape(1, -1, 1, 1)
    return y + residual


if __name__ == "__main__":
    key = jax.random.PRNGKey(0)
    k1, k2 = jax.random.split(key)

    N, C, H, W = 1, 96, 7, 7
    x136 = jax.random.normal(k1, (N, C, H, W), dtype=jnp.float32)
    x129 = jax.random.normal(k2, (N, C, H, W), dtype=jnp.float32)

    # BatchNorm2d affine params at PyTorch default init.
    gamma = jnp.ones((C,), dtype=jnp.float32)
    beta = jnp.zeros((C,), dtype=jnp.float32)

    # Reference first (defensive w.r.t. the input/output buffer aliasing).
    ref = _reference(x136, x129, gamma, beta)

    out = batchnorm_add(x136, x129, gamma, beta)
    out = jax.block_until_ready(out)

    assert out.shape == (N, C, H, W)
    assert jnp.allclose(out, ref, atol=1e-4, rtol=1e-4)

    print("KERNEL_OK")
</pallas_src>

<mosaic_0001>
module attributes {stable_mosaic.version = 11 : i64} {
  func.func @_bn_add_fused_kernel(%arg0: i32, %arg1: memref<48x49xf32, #tpu.memory_space<vmem>>, %arg2: memref<48x49xf32, #tpu.memory_space<vmem>>, %arg3: memref<48x1xf32, #tpu.memory_space<vmem>>, %arg4: memref<48x1xf32, #tpu.memory_space<vmem>>, %arg5: memref<48x49xf32, #tpu.memory_space<vmem>>) attributes {dimension_semantics = [#tpu.dimension_semantics<parallel>], iteration_bounds = array<i64: 2>, scalar_prefetch = 0 : i64, scratch_operands = 0 : i64, tpu.core_type = #tpu.core_type<tc>, window_params = [{transform_indices = @transform_0, window_bounds = array<i64: 48, 49>}, {transform_indices = @transform_1, window_bounds = array<i64: 48, 49>}, {transform_indices = @transform_2, window_bounds = array<i64: 48, 1>}, {transform_indices = @transform_3, window_bounds = array<i64: 48, 1>}, {transform_indices = @transform_4, window_bounds = array<i64: 48, 49>}]} {
    %c0 = arith.constant 0 : index
    %c0_0 = arith.constant 0 : index
    %0 = vector.load %arg1[%c0, %c0_0] : memref<48x49xf32, #tpu.memory_space<vmem>>, vector<48x49xf32>
    %cst = arith.constant dense<0.000000e+00> : vector<48xf32>
    %1 = vector.multi_reduction <add>, %0, %cst [1] : vector<48x49xf32> to vector<48xf32>
    %2 = vector.shape_cast %1 : vector<48xf32> to vector<48x1xf32>
    %cst_1 = arith.constant 0.0204081628 : f32
    %3 = vector.broadcast %cst_1 : f32 to vector<48x1xf32>
    %4 = arith.mulf %2, %3 : vector<48x1xf32>
    %5 = vector.broadcast %4 : vector<48x1xf32> to vector<48x49xf32>
    %6 = arith.subf %0, %5 : vector<48x49xf32>
    %7 = arith.mulf %6, %6 : vector<48x49xf32>
    %cst_2 = arith.constant dense<0.000000e+00> : vector<48xf32>
    %8 = vector.multi_reduction <add>, %7, %cst_2 [1] : vector<48x49xf32> to vector<48xf32>
    %9 = vector.shape_cast %8 : vector<48xf32> to vector<48x1xf32>
    %cst_3 = arith.constant 0.0204081628 : f32
    %10 = vector.broadcast %cst_3 : f32 to vector<48x1xf32>
    %11 = arith.mulf %9, %10 : vector<48x1xf32>
    %cst_4 = arith.constant 9.99999974E-6 : f32
    %12 = vector.broadcast %cst_4 : f32 to vector<48x1xf32>
    %13 = arith.addf %11, %12 : vector<48x1xf32>
    %14 = math.rsqrt %13 : vector<48x1xf32>
    %c0_5 = arith.constant 0 : index
    %c0_6 = arith.constant 0 : index
    %15 = vector.load %arg3[%c0_5, %c0_6] : memref<48x1xf32, #tpu.memory_space<vmem>>, vector<48x1xf32>
    %16 = arith.mulf %15, %14 : vector<48x1xf32>
    %c0_7 = arith.constant 0 : index
    %c0_8 = arith.constant 0 : index
    %17 = vector.load %arg4[%c0_7, %c0_8] : memref<48x1xf32, #tpu.memory_space<vmem>>, vector<48x1xf32>
    %18 = arith.mulf %4, %16 : vector<48x1xf32>
    %19 = arith.subf %17, %18 : vector<48x1xf32>
    %20 = vector.broadcast %16 : vector<48x1xf32> to vector<48x49xf32>
    %21 = arith.mulf %0, %20 : vector<48x49xf32>
    %22 = vector.broadcast %19 : vector<48x1xf32> to vector<48x49xf32>
    %23 = arith.addf %21, %22 : vector<48x49xf32>
    %c0_9 = arith.constant 0 : index
    %c0_10 = arith.constant 0 : index
    %24 = vector.load %arg2[%c0_9, %c0_10] : memref<48x49xf32, #tpu.memory_space<vmem>>, vector<48x49xf32>
    %25 = arith.addf %23, %24 : vector<48x49xf32>
    %c0_11 = arith.constant 0 : index
    %c0_12 = arith.constant 0 : index
    %26 = vector.load %arg5[%c0_11, %c0_12] : memref<48x49xf32, #tpu.memory_space<vmem>>, vector<48x49xf32>
    tpu.vector_store %arg5[%c0_11, %c0_12], %25 {strides = array<i32>} : memref<48x49xf32, #tpu.memory_space<vmem>>, vector<48x49xf32>,
    return
  }
  func.func @transform_0(%arg0: i32) -> (i32, i32) {
    %c0_i32 = arith.constant 0 : i32
    %c0_i32_0 = arith.constant 0 : i32
    return %arg0, %c0_i32 : i32, i32
  }
  func.func @transform_1(%arg0: i32) -> (i32, i32) {
    %c0_i32 = arith.constant 0 : i32
    %c0_i32_0 = arith.constant 0 : i32
    return %arg0, %c0_i32 : i32, i32
  }
  func.func @transform_2(%arg0: i32) -> (i32, i32) {
    %c0_i32 = arith.constant 0 : i32
    %c0_i32_0 = arith.constant 0 : i32
    return %arg0, %c0_i32 : i32, i32
  }
  func.func @transform_3(%arg0: i32) -> (i32, i32) {
    %c0_i32 = arith.constant 0 : i32
    %c0_i32_0 = arith.constant 0 : i32
    return %arg0, %c0_i32 : i32, i32
  }
  func.func @transform_4(%arg0: i32) -> (i32, i32) {
    %c0_i32 = arith.constant 0 : i32
    %c0_i32_0 = arith.constant 0 : i32
    return %arg0, %c0_i32 : i32, i32
  }
}

</mosaic_0001>

<llo_original>
// kernel: _batchnorm_add_impl.1
$region0: #{_batchnorm_add_impl.1}
  #allocation0 [shape = 'u32[]', space=smem, size = 0x4, offset = 0x4, fixed_abs, tag = 'smem constant byte address 0x4 - core index']
  #allocation1 [shape = 'u32[144,128]{1,0:T(1,128)}', space=vmem, size = 0x12000, scoped, tag = 'internal scratch']
  %s0 = inlined_call_operand.vmem [shape: f32[96,49], index: 0, kind: input, shape index: {}, may-alias: {0,4}]
  %s1 = inlined_call_operand.vmem [shape: f32[96,49], index: 1, kind: input, shape index: {}]
  %s2 = inlined_call_operand.vmem [shape: f32[96,1], index: 2, kind: input, shape index: {}]
  %s3 = inlined_call_operand.vmem [shape: f32[96,1], index: 3, kind: input, shape index: {}]
  %s4 = inlined_call_operand.vmem [shape: f32[96,49], index: 4, kind: output, shape index: {}, may-alias: {0,4}]
  %s5 = sld [smem:[#allocation0]]
  $region49: #{_batchnorm_add_impl.1} parent=0
    _
  %s7 = ssub.s32 1, %s5
  %s8 = scalar_select 0, %s7, %s5
  loop: start=0, step=1, limit=4
  $region2: #{_batchnorm_add_impl.1} parent=0 // loop_pre_header
    _
  $region3: #{_batchnorm_add_impl.1} parent=0 // loop_header
    %s10 = sphi 0, %s14
    %p11 = scmp.ge.s32.totalorder %s10, 4
    %s20 = sphi 0, %s22
    %s23 = sphi 0, %s20
    %s24 = sphi 0, %s23
    %s40 = sphi 0, %s24
    %s46 = sphi 0, %s48
    %s49 = sphi 0, %s46
    %s50 = sphi 0, %s49
    %s66 = sphi 0, %s50
    %s72 = sphi 0, %s74
    %s75 = sphi 0, %s72
    %s76 = sphi 0, %s75
    %s92 = sphi 0, %s76
    %s98 = sphi 0, %s100
    %s101 = sphi 0, %s98
    %s102 = sphi 0, %s101
    %s118 = sphi 0, %s102
    %s124 = sphi 0, %s126
    %s127 = sphi 0, %s124
    %s128 = sphi 0, %s127
    %s144 = sphi 0, %s128
  $region4: #{_batchnorm_add_impl.1} parent=0 // loop_header_branch
    %13 = sbr.rel (%p11) target = $region8
  $region5: #{_batchnorm_add_impl.1} parent=0 // loop_body
    %s15 = ssub.s32 %s10, 1
    %s16 = ssub.s32 %s10, 2
    %s17 = sadd.s32 %s10, 1
    %s18 = ssub.s32 %s10, %s17
    %p19 = scmp.eq.s32.totalorder %s18, 0
    %s21 = sadd.s32 %s20, 1
    %s22 = scalar_select %p19, %s20, %s21
    %p25 = pneg %p19
    %p26 = scmp.eq.s32.totalorder %s10, 1
    %p27 = por %p25, %p26
    %p28 = scmp.ne.s32.totalorder %s20, %s23
    %p29 = scmp.eq.s32.totalorder %s10, 0
    %p30 = por %p28, %p29
    %p31 = scmp.ne.s32.totalorder %s20, %s23
    %p32 = scmp.eq.s32.totalorder %s15, 1
    %p33 = por %p31, %p32
    %p34 = scmp.ne.s32.totalorder %s23, %s24
    %p35 = scmp.eq.s32.totalorder %s15, 0
    %p36 = por %p34, %p35
    %p37 = scmp.ne.s32.totalorder %s23, %s24
    %p38 = scmp.eq.s32.totalorder %s16, 1
    %p39 = por %p37, %p38
    %p41 = scmp.ne.s32.totalorder %s24, %s40
    %p42 = scmp.eq.s32.totalorder %s16, 0
    %p43 = por %p41, %p42
    %s44 = ssub.s32 %s10, %s17
    %p45 = scmp.eq.s32.totalorder %s44, 0
    %s47 = sadd.s32 %s46, 1
    %s48 = scalar_select %p45, %s46, %s47
    %p51 = pneg %p45
    %p52 = scmp.eq.s32.totalorder %s10, 1
    %p53 = por %p51, %p52
    %p54 = scmp.ne.s32.totalorder %s46, %s49
    %p55 = scmp.eq.s32.totalorder %s10, 0
    %p56 = por %p54, %p55
    %p57 = scmp.ne.s32.totalorder %s46, %s49
    %p58 = scmp.eq.s32.totalorder %s15, 1
    %p59 = por %p57, %p58
    %p60 = scmp.ne.s32.totalorder %s49, %s50
    %p61 = scmp.eq.s32.totalorder %s15, 0
    %p62 = por %p60, %p61
    %p63 = scmp.ne.s32.totalorder %s49, %s50
    %p64 = scmp.eq.s32.totalorder %s16, 1
    %p65 = por %p63, %p64
    %p67 = scmp.ne.s32.totalorder %s50, %s66
    %p68 = scmp.eq.s32.totalorder %s16, 0
    %p69 = por %p67, %p68
    %s70 = ssub.s32 %s10, %s17
    %p71 = scmp.eq.s32.totalorder %s70, 0
    %s73 = sadd.s32 %s72, 1
    %s74 = scalar_select %p71, %s72, %s73
    %p77 = pneg %p71
    %p78 = scmp.eq.s32.totalorder %s10, 1
    %p79 = por %p77, %p78
    %p80 = scmp.ne.s32.totalorder %s72, %s75
    %p81 = scmp.eq.s32.totalorder %s10, 0
    %p82 = por %p80, %p81
    %p83 = scmp.ne.s32.totalorder %s72, %s75
    %p84 = scmp.eq.s32.totalorder %s15, 1
    %p85 = por %p83, %p84
    %p86 = scmp.ne.s32.totalorder %s75, %s76
    %p87 = scmp.eq.s32.totalorder %s15, 0
    %p88 = por %p86, %p87
    %p89 = scmp.ne.s32.totalorder %s75, %s76
    %p90 = scmp.eq.s32.totalorder %s16, 1
    %p91 = por %p89, %p90
    %p93 = scmp.ne.s32.totalorder %s76, %s92
    %p94 = scmp.eq.s32.totalorder %s16, 0
    %p95 = por %p93, %p94
    %s96 = ssub.s32 %s10, %s17
    %p97 = scmp.eq.s32.totalorder %s96, 0
    %s99 = sadd.s32 %s98, 1
    %s100 = scalar_select %p97, %s98, %s99
    %p103 = pneg %p97
    %p104 = scmp.eq.s32.totalorder %s10, 1
    %p105 = por %p103, %p104
    %p106 = scmp.ne.s32.totalorder %s98, %s101
    %p107 = scmp.eq.s32.totalorder %s10, 0
    %p108 = por %p106, %p107
    %p109 = scmp.ne.s32.totalorder %s98, %s101
    %p110 = scmp.eq.s32.totalorder %s15, 1
    %p111 = por %p109, %p110
    %p112 = scmp.ne.s32.totalorder %s101, %s102
    %p113 = scmp.eq.s32.totalorder %s15, 0
    %p114 = por %p112, %p113
    %p115 = scmp.ne.s32.totalorder %s101, %s102
    %p116 = scmp.eq.s32.totalorder %s16, 1
    %p117 = por %p115, %p116
    %p119 = scmp.ne.s32.totalorder %s102, %s118
    %p120 = scmp.eq.s32.totalorder %s16, 0
    %p121 = por %p119, %p120
    %s122 = ssub.s32 %s10, %s17
    %p123 = scmp.eq.s32.totalorder %s122, 0
    %s125 = sadd.s32 %s124, 1
    %s126 = scalar_select %p123, %s124, %s125
    %p129 = pneg %p123
    %p130 = scmp.eq.s32.totalorder %s10, 1
    %p131 = por %p129, %p130
    %p132 = scmp.ne.s32.totalorder %s124, %s127
    %p133 = scmp.eq.s32.totalorder %s10, 0
    %p134 = por %p132, %p133
    %p135 = scmp.ne.s32.totalorder %s124, %s127
    %p136 = scmp.eq.s32.totalorder %s15, 1
    %p137 = por %p135, %p136
    %p138 = scmp.ne.s32.totalorder %s127, %s128
    %p139 = scmp.eq.s32.totalorder %s15, 0
    %p140 = por %p138, %p139
    %p141 = scmp.ne.s32.totalorder %s127, %s128
    %p142 = scmp.eq.s32.totalorder %s16, 1
    %p143 = por %p141, %p142
    %p145 = scmp.ne.s32.totalorder %s128, %s144
    %p146 = scmp.eq.s32.totalorder %s16, 0
    %p147 = por %p145, %p146
    %p148 = scmp.le.s32.totalorder 1, %s10
    %p149 = scmp.lt.s32.totalorder %s10, 3
    %p150 = pnand %p148, %p149
    %p151 = pneg %p150
    // Predicated region
    $region9: #{_batchnorm_add_impl.1} parent=5 // pred_check
      _
    $region10: #{_batchnorm_add_impl.1} parent=5 // pred_check_branch
      %153 = sbr.rel (%p150) target = $region12
    $region11: #{_batchnorm_add_impl.1} parent=5 // pred_region
      %s154 = ssub.s32 %s10, 1
    $region12: #{_batchnorm_add_impl.1} parent=5 // pred_fallthru
      _
    %p155 = scmp.lt.s32.totalorder %s10, 2
    // Predicated region
    $region13: #{_batchnorm_add_impl.1} parent=5 // pred_check
      %p156 = pneg %p155
    $region14: #{_batchnorm_add_impl.1} parent=5 // pred_check_branch
      %158 = sbr.rel (%p156) target = $region16
    $region15: #{_batchnorm_add_impl.1} parent=5 // pred_region
      // Predicated region
      $region17: #{_batchnorm_add_impl.1} parent=15 // pred_check
        %p159 = pneg %p30
      $region18: #{_batchnorm_add_impl.1} parent=15 // pred_check_branch
        %161 = sbr.rel (%p159) target = $region20
      $region19: #{_batchnorm_add_impl.1} parent=15 // pred_region
        %s162 = smul.u32 6, %s10
        %p163 = scmp.lt.s32.totalorder %s162, 11
        %s164 = scalar_select %p163, %s162, 11
        %s165 = smul.addr %s164, 8
        %s166 = scalar_lea.vmem %s0, %s165
        %s167 = smul.u32 6, %s10
      $region20: #{_batchnorm_add_impl.1} parent=15 // pred_fallthru
        _
      // Predicated region
      $region21: #{_batchnorm_add_impl.1} parent=15 // pred_check
        %p168 = pneg %p56
      $region22: #{_batchnorm_add_impl.1} parent=15 // pred_check_branch
        %170 = sbr.rel (%p168) target = $region24
      $region23: #{_batchnorm_add_impl.1} parent=15 // pred_region
        %s171 = smul.u32 6, %s10
        %p172 = scmp.lt.s32.totalorder %s171, 11
        %s173 = scalar_select %p172, %s171, 11
        %s174 = smul.addr %s173, 8
        %s175 = scalar_lea.vmem %s1, %s174
        %s176 = smul.u32 6, %s10
      $region24: #{_batchnorm_add_impl.1} parent=15 // pred_fallthru
        _
      // Predicated region
      $region25: #{_batchnorm_add_impl.1} parent=15 // pred_check
        %p177 = pneg %p82
      $region26: #{_batchnorm_add_impl.1} parent=15 // pred_check_branch
        %179 = sbr.rel (%p177) target = $region28
      $region27: #{_batchnorm_add_impl.1} parent=15 // pred_region
        %s180 = smul.u32 6, %s10
        %p181 = scmp.lt.s32.totalorder %s180, 11
        %s182 = scalar_select %p181, %s180, 11
        %s183 = smul.addr %s182, 8
        %s184 = scalar_lea.vmem %s2, %s183
        %s185 = smul.u32 6, %s10
      $region28: #{_batchnorm_add_impl.1} parent=15 // pred_fallthru
        _
      // Predicated region
      $region29: #{_batchnorm_add_impl.1} parent=15 // pred_check
        %p186 = pneg %p108
      $region30: #{_batchnorm_add_impl.1} parent=15 // pred_check_branch
        %188 = sbr.rel (%p186) target = $region32
      $region31: #{_batchnorm_add_impl.1} parent=15 // pred_region
        %s189 = smul.u32 6, %s10
        %p190 = scmp.lt.s32.totalorder %s189, 11
        %s191 = scalar_select %p190, %s189, 11
        %s192 = smul.addr %s191, 8
        %s193 = scalar_lea.vmem %s3, %s192
        %s194 = smul.u32 6, %s10
      $region32: #{_batchnorm_add_impl.1} parent=15 // pred_fallthru
        _
    $region16: #{_batchnorm_add_impl.1} parent=5 // pred_fallthru
      _
    %p195 = scmp.le.s32.totalorder 1, %s10
    %p196 = scmp.lt.s32.totalorder %s10, 3
    %p197 = pnand %p195, %p196
    %p198 = pneg %p197
    // Predicated region
    $region33: #{_batchnorm_add_impl.1} parent=5 // pred_check
      _
    $region34: #{_batchnorm_add_impl.1} parent=5 // pred_check_branch
      %200 = sbr.rel (%p197) target = $region36
    $region35: #{_batchnorm_add_impl.1} parent=5 // pred_region
      %s201 = ssub.s32 %s10, 1
      %s202 = smul.u32 6, %s15
      %p203 = scmp.lt.s32.totalorder %s202, 11
      %s204 = scalar_select %p203, %s202, 11
      %s205 = smul.addr %s204, 8
      %s206 = scalar_lea.vmem %s0, %s205
      %p207 = pneg %p36
      %p208 = pneg %p33
      %s209 = smul.u32 6, %s15
      %p210 = scmp.lt.s32.totalorder %s209, 11
      %s211 = scalar_select %p210, %s209, 11
      %s212 = smul.addr %s211, 8
      %s213 = scalar_lea.vmem %s1, %s212
      %p214 = pneg %p62
      %p215 = pneg %p59
      %s216 = smul.u32 6, %s15
      %p217 = scmp.lt.s32.totalorder %s216, 11
      %s218 = scalar_select %p217, %s216, 11
      %s219 = smul.addr %s218, 8
      %s220 = scalar_lea.vmem %s2, %s219
      %p221 = pneg %p88
      %p222 = pneg %p85
      %s223 = smul.u32 6, %s15
      %p224 = scmp.lt.s32.totalorder %s223, 11
      %s225 = scalar_select %p224, %s223, 11
      %s226 = smul.addr %s225, 8
      %s227 = scalar_lea.vmem %s3, %s226
      %p228 = pneg %p114
      %p229 = pneg %p111
      %p230 = pneg %p140
      %p231 = pneg %p137
      %s232 = smul.u32 6, %s15
      %p233 = scmp.lt.s32.totalorder %s232, 11
      %s234 = scalar_select %p233, %s232, 11
      %s235 = smul.addr %s234, 8
      %s236 = scalar_lea.vmem %s4, %s235
      %s237 = smul.u32 6, %s15
      %p238 = scmp.lt.s32.totalorder %s237, 11
      %s239 = scalar_select %p238, %s237, 11
      %s240 = smul.addr %s239, 8
      %s241 = scalar_lea.vmem %s0, %s240
      %s242 = smul.u32 6, %s15
      %s243 = smul.u32 6, %s15
      %p244 = scmp.lt.s32.totalorder %s243, 11
      %s245 = scalar_select %p244, %s243, 11
      %s246 = smul.addr %s245, 8
      %s247 = scalar_lea.vmem %s1, %s246
      %s248 = smul.u32 6, %s15
      %s249 = smul.u32 6, %s15
      %p250 = scmp.lt.s32.totalorder %s249, 11
      %s251 = scalar_select %p250, %s249, 11
      %s252 = smul.addr %s251, 8
      %s253 = scalar_lea.vmem %s2, %s252
      %s254 = smul.u32 6, %s15
      %s255 = smul.u32 6, %s15
      %p256 = scmp.lt.s32.totalorder %s255, 11
      %s257 = scalar_select %p256, %s255, 11
      %s258 = smul.addr %s257, 8
      %s259 = scalar_lea.vmem %s3, %s258
      %s260 = smul.u32 6, %s15
      %s261 = smul.u32 6, %s15
      %p262 = scmp.lt.s32.totalorder %s261, 11
      %s263 = scalar_select %p262, %s261, 11
      %s264 = smul.addr %s263, 8
      %s265 = scalar_lea.vmem %s4, %s264
      %s266 = smul.u32 6, %s15
      %v267 = vld [vmem:[%s241] sm:$0xff]
      %v268 = vld [vmem:[%s241 + $0x8] sm:$0xff]
      %v269 = vld [vmem:[%s241 + $0x10] sm:$0xff]
      %v270 = vld [vmem:[%s241 + $0x18] sm:$0xff]
      %v271 = vld [vmem:[%s241 + $0x20] sm:$0xff]
      %v272 = vld [vmem:[%s241 + $0x28] sm:$0xff]
      %vm273 = vcmask 400384
      %v274 = vsel %vm273, %v267, 0.0
      %275 = vadd.xlane.f32.xlu0 %v274
      %v276 = vpop.xlane.xlu0 %275
      %v277 = vsel %vm273, %v268, 0.0
      %278 = vadd.xlane.f32.xlu0 %v277
      %v279 = vpop.xlane.xlu0 %278
      %v280 = vsel %vm273, %v269, 0.0
      %281 = vadd.xlane.f32.xlu0 %v280
      %v282 = vpop.xlane.xlu0 %281
      %v283 = vsel %vm273, %v270, 0.0
      %284 = vadd.xlane.f32.xlu0 %v283
      %v285 = vpop.xlane.xlu0 %284
      %v286 = vsel %vm273, %v271, 0.0
      %287 = vadd.xlane.f32.xlu0 %v286
      %v288 = vpop.xlane.xlu0 %287
      %v289 = vsel %vm273, %v272, 0.0
      %290 = vadd.xlane.f32.xlu0 %v289
      %v291 = vpop.xlane.xlu0 %290
      %v292 = vmul.f32 %v276, 0.020408163
      %v293 = vmul.f32 %v279, 0.020408163
      %v294 = vmul.f32 %v282, 0.020408163
      %v295 = vmul.f32 %v285, 0.020408163
      %v296 = vmul.f32 %v288, 0.020408163
      %v297 = vmul.f32 %v291, 0.020408163
      %v298 = vsub.f32 %v267, %v292
      %v299 = vsub.f32 %v268, %v293
      %v300 = vsub.f32 %v269, %v294
      %v301 = vsub.f32 %v270, %v295
      %v302 = vsub.f32 %v271, %v296
      %v303 = vsub.f32 %v272, %v297
      %v304 = vmul.f32 %v298, %v298
      %v305 = vmul.f32 %v299, %v299
      %v306 = vmul.f32 %v300, %v300
      %v307 = vmul.f32 %v301, %v301
      %v308 = vmul.f32 %v302, %v302
      %v309 = vmul.f32 %v303, %v303
      %v310 = vsel %vm273, %v304, 0.0
      %311 = vadd.xlane.f32.xlu0 %v310
      %v312 = vpop.xlane.xlu0 %311
      %v313 = vsel %vm273, %v305, 0.0
      %314 = vadd.xlane.f32.xlu0 %v313
      %v315 = vpop.xlane.xlu0 %314
      %v316 = vsel %vm273, %v306, 0.0
      %317 = vadd.xlane.f32.xlu0 %v316
      %v318 = vpop.xlane.xlu0 %317
      %v319 = vsel %vm273, %v307, 0.0
      %320 = vadd.xlane.f32.xlu0 %v319
      %v321 = vpop.xlane.xlu0 %320
      %v322 = vsel %vm273, %v308, 0.0
      %323 = vadd.xlane.f32.xlu0 %v322
      %v324 = vpop.xlane.xlu0 %323
      %v325 = vsel %vm273, %v309, 0.0
      %326 = vadd.xlane.f32.xlu0 %v325
      %v327 = vpop.xlane.xlu0 %326
      %v328 = vmul.f32 %v312, 0.020408163
      %v329 = vmul.f32 %v315, 0.020408163
      %v330 = vmul.f32 %v318, 0.020408163
      %v331 = vmul.f32 %v321, 0.020408163
      %v332 = vmul.f32 %v324, 0.020408163
      %v333 = vmul.f32 %v327, 0.020408163
      %v334 = vadd.f32 %v328, 1e-05
      %v335 = vadd.f32 %v329, 1e-05
      %v336 = vadd.f32 %v330, 1e-05
      %v337 = vadd.f32 %v331, 1e-05
      %v338 = vadd.f32 %v332, 1e-05
      %v339 = vadd.f32 %v333, 1e-05
      %v340 = vrsqrt.pop %v334
      %v341 = vrsqrt.pop %v335
      %v342 = vrsqrt.pop %v336
      %v343 = vrsqrt.pop %v337
      %v344 = vrsqrt.pop %v338
      %v345 = vrsqrt.pop %v339
      %v346 = vld [vmem:[%s253] sm:$0xff]
      %v347 = vld [vmem:[%s253 + $0x8] sm:$0xff]
      %v348 = vld [vmem:[%s253 + $0x10] sm:$0xff]
      %v349 = vld [vmem:[%s253 + $0x18] sm:$0xff]
      %v350 = vld [vmem:[%s253 + $0x20] sm:$0xff]
      %v351 = vld [vmem:[%s253 + $0x28] sm:$0xff]
      %v352 = vmul.f32 %v346, %v340
      %v353 = vmul.f32 %v347, %v341
      %v354 = vmul.f32 %v348, %v342
      %v355 = vmul.f32 %v349, %v343
      %v356 = vmul.f32 %v350, %v344
      %v357 = vmul.f32 %v351, %v345
      %v358 = vld [vmem:[%s259] sm:$0xff]
      %v359 = vld [vmem:[%s259 + $0x8] sm:$0xff]
      %v360 = vld [vmem:[%s259 + $0x10] sm:$0xff]
      %v361 = vld [vmem:[%s259 + $0x18] sm:$0xff]
      %v362 = vld [vmem:[%s259 + $0x20] sm:$0xff]
      %v363 = vld [vmem:[%s259 + $0x28] sm:$0xff]
      %v364 = vmul.f32 %v292, %v352
      %v365 = vmul.f32 %v293, %v353
      %v366 = vmul.f32 %v294, %v354
      %v367 = vmul.f32 %v295, %v355
      %v368 = vmul.f32 %v296, %v356
      %v369 = vmul.f32 %v297, %v357
      %v370 = vsub.f32 %v358, %v364
      %v371 = vsub.f32 %v359, %v365
      %v372 = vsub.f32 %v360, %v366
      %v373 = vsub.f32 %v361, %v367
      %v374 = vsub.f32 %v362, %v368
      %v375 = vsub.f32 %v363, %v369
      %377 = vset.pattern.permute.xlu0 0
      %378 = vperm.xlu0 %377, %v352
      %v379 = vpop.permute.xlu0 %378
      %382 = vset.pattern.permute.xlu0 0
      %383 = vperm.xlu0 %382, %v353
      %v384 = vpop.permute.xlu0 %383
      %387 = vset.pattern.permute.xlu0 0
      %388 = vperm.xlu0 %387, %v354
      %v389 = vpop.permute.xlu0 %388
      %392 = vset.pattern.permute.xlu0 0
      %393 = vperm.xlu0 %392, %v355
      %v394 = vpop.permute.xlu0 %393
      %397 = vset.pattern.permute.xlu0 0
      %398 = vperm.xlu0 %397, %v356
      %v399 = vpop.permute.xlu0 %398
      %402 = vset.pattern.permute.xlu0 0
      %403 = vperm.xlu0 %402, %v357
      %v404 = vpop.permute.xlu0 %403
      %v406 = vmul.f32 %v267, %v379
      %v407 = vmul.f32 %v268, %v384
      %v408 = vmul.f32 %v269, %v389
      %v409 = vmul.f32 %v270, %v394
      %v410 = vmul.f32 %v271, %v399
      %v411 = vmul.f32 %v272, %v404
      %413 = vset.pattern.permute.xlu0 0
      %414 = vperm.xlu0 %413, %v370
      %v415 = vpop.permute.xlu0 %414
      %418 = vset.pattern.permute.xlu0 0
      %419 = vperm.xlu0 %418, %v371
      %v420 = vpop.permute.xlu0 %419
      %423 = vset.pattern.permute.xlu0 0
      %424 = vperm.xlu0 %423, %v372
      %v425 = vpop.permute.xlu0 %424
      %428 = vset.pattern.permute.xlu0 0
      %429 = vperm.xlu0 %428, %v373
      %v430 = vpop.permute.xlu0 %429
      %433 = vset.pattern.permute.xlu0 0
      %434 = vperm.xlu0 %433, %v374
      %v435 = vpop.permute.xlu0 %434
      %438 = vset.pattern.permute.xlu0 0
      %439 = vperm.xlu0 %438, %v375
      %v440 = vpop.permute.xlu0 %439
      %v442 = vadd.f32 %v406, %v415
      %v443 = vadd.f32 %v407, %v420
      %v444 = vadd.f32 %v408, %v425
      %v445 = vadd.f32 %v409, %v430
      %v446 = vadd.f32 %v410, %v435
      %v447 = vadd.f32 %v411, %v440
      %v448 = vld [vmem:[%s247] sm:$0xff]
      %v449 = vld [vmem:[%s247 + $0x8] sm:$0xff]
      %v450 = vld [vmem:[%s247 + $0x10] sm:$0xff]
      %v451 = vld [vmem:[%s247 + $0x18] sm:$0xff]
      %v452 = vld [vmem:[%s247 + $0x20] sm:$0xff]
      %v453 = vld [vmem:[%s247 + $0x28] sm:$0xff]
      %v454 = vadd.f32 %v442, %v448
      %v455 = vadd.f32 %v443, %v449
      %v456 = vadd.f32 %v444, %v450
      %v457 = vadd.f32 %v445, %v451
      %v458 = vadd.f32 %v446, %v452
      %v459 = vadd.f32 %v447, %v453
      %460 = vst.msk [vmem:[%s265] sm:$0xff] %vm273, %v454
      %461 = vst.msk [vmem:[%s265 + $0x8] sm:$0xff] %vm273, %v455
      %462 = vst.msk [vmem:[%s265 + $0x10] sm:$0xff] %vm273, %v456
      %463 = vst.msk [vmem:[%s265 + $0x18] sm:$0xff] %vm273, %v457
      %464 = vst.msk [vmem:[%s265 + $0x20] sm:$0xff] %vm273, %v458
      %465 = vst.msk [vmem:[%s265 + $0x28] sm:$0xff] %vm273, %v459
      %s466 = smul.u32 6, %s15
      %p467 = scmp.lt.s32.totalorder %s466, 11
      %s468 = scalar_select %p467, %s466, 11
      %s469 = smul.addr %s468, 8
      %s470 = scalar_lea.vmem %s4, %s469
      // Predicated region
      $region37: #{_batchnorm_add_impl.1} parent=35 // pred_check
        %p471 = pneg %p137
      $region38: #{_batchnorm_add_impl.1} parent=35 // pred_check_branch
        %473 = sbr.rel (%p471) target = $region40
      $region39: #{_batchnorm_add_impl.1} parent=35 // pred_region
        %s474 = smul.u32 6, %s15
      $region40: #{_batchnorm_add_impl.1} parent=35 // pred_fallthru
        _
    $region36: #{_batchnorm_add_impl.1} parent=5 // pred_fallthru
      _
    %p475 = scmp.le.s32.totalorder 2, %s10
    // Predicated region
    $region41: #{_batchnorm_add_impl.1} parent=5 // pred_check
      %p476 = pneg %p475
    $region42: #{_batchnorm_add_impl.1} parent=5 // pred_check_branch
      %478 = sbr.rel (%p476) target = $region44
    $region43: #{_batchnorm_add_impl.1} parent=5 // pred_region
      %s479 = ssub.s32 %s10, 2
      // Predicated region
      $region45: #{_batchnorm_add_impl.1} parent=43 // pred_check
        %p480 = pneg %p143
      $region46: #{_batchnorm_add_impl.1} parent=43 // pred_check_branch
        %482 = sbr.rel (%p480) target = $region48
      $region47: #{_batchnorm_add_impl.1} parent=43 // pred_region
        %s483 = smul.u32 6, %s16
        %p484 = scmp.lt.s32.totalorder %s483, 11
        %s485 = scalar_select %p484, %s483, 11
        %s486 = smul.addr %s485, 8
        %s487 = scalar_lea.vmem %s4, %s486
      $region48: #{_batchnorm_add_impl.1} parent=43 // pred_fallthru
        _
    $region44: #{_batchnorm_add_impl.1} parent=5 // pred_fallthru
      _
  $region6: #{_batchnorm_add_impl.1} parent=0 // loop_footer
    %s14 = sadd.s32 1, %s10
  $region7: #{_batchnorm_add_impl.1} parent=0 // loop_footer_branch
    %9 = sbr.rel target = $region3
  $region8: #{_batchnorm_add_impl.1} parent=0 // loop_exit
    _

</llo_original>
